<compile_context>
chip_gen: v6e
topology: v6e:2x2x1
jax: 0.10.0
libtpu: 0.0.40
codegen_flags: <defaults>
</compile_context>

<pallas_src>
import math

import jax
import jax.numpy as jnp
from jax.experimental import pallas as pl
from jax.experimental.pallas import tpu as pltpu


_LANE = 128
_PER_BUFFER_BYTES = 4 * 1024 * 1024    # x-tile footprint per pipeline buffer
_VMEM_LIMIT_BYTES = 32 * 1024 * 1024   # explicit scoped-VMEM budget (all gens)


def _head_kernel(x_ref, w_ref, b_ref, o_ref, acc_ref):
    """x_ref: (tN, C, tHW)  w_ref: (C, M)  b_ref: (1, M)  o_ref: (tN, M)
    acc_ref: (tN, C) f32 running sum over the HW (reduction) grid axis."""
    k = pl.program_id(1)

    @pl.when(k == 0)
    def _():
        acc_ref[...] = jnp.zeros_like(acc_ref)

    # Partial global-average-pool reduction for this HW tile. Accumulate in f32
    # without materializing a full f32 copy of the streamed tile.
    acc_ref[...] += jnp.sum(x_ref[...], axis=-1, dtype=jnp.float32)

    @pl.when(k == pl.num_programs(1) - 1)
    def _():
        # 1/(H*W) is already folded into w_ref by the wrapper.
        logits = jnp.dot(acc_ref[...], w_ref[...],
                         preferred_element_type=jnp.float32)
        o_ref[...] = (logits + b_ref[...]).astype(o_ref.dtype)


def _choose_tiles(n, c, hw, itemsize):
    """Pick (tN, tHW) so a double-buffered x tile stays ~4 MiB per buffer."""
    tn = n if n < 8 else 8                      # full N (small) or sublane-aligned 8
    cap = _PER_BUFFER_BYTES // max(1, tn * c * itemsize)
    if hw <= max(cap, _LANE):
        thw = hw                                # full-extent HW block: no (8,128) issue
    else:
        thw = max(_LANE, (cap // _LANE) * _LANE)  # lane-aligned streaming tile
    return tn, thw


def simple_head_single(feature_nchw, weight_cm, bias_m):
    """One head: feature (N, C, H, W) -> logits (N, M) in float32."""
    N, C, H, W = feature_nchw.shape
    M = weight_cm.shape[1]
    HW = H * W

    x3d = feature_nchw.reshape(N, C, HW)
    tn, thw = _choose_tiles(N, C, HW, x3d.dtype.itemsize)

    # Zero-pad HW to a multiple of the tile: zeros do not change the running
    # sum, and the mean divisor below always uses the true H*W.
    pad = (-HW) % thw
    if pad:
        x3d = jnp.pad(x3d, ((0, 0), (0, 0), (0, pad)))
    hw_padded = HW + pad

    # Fold the AdaptiveAvgPool2d mean divisor into the weight (done once).
    w_scaled = weight_cm.astype(jnp.float32) / float(HW)
    b2d = bias_m.reshape(1, M).astype(jnp.float32)

    grid = (pl.cdiv(N, tn), hw_padded // thw)

    cost = pl.CostEstimate(
        flops=2 * N * C * HW + 2 * N * C * M,
        transcendentals=0,
        bytes_accessed=int(x3d.size * x3d.dtype.itemsize
                           + w_scaled.size * 4 + b2d.size * 4 + N * M * 4),
    )

    return pl.pallas_call(
        _head_kernel,
        out_shape=jax.ShapeDtypeStruct((N, M), jnp.float32),
        grid=grid,
        in_specs=[
            pl.BlockSpec((tn, C, thw), lambda i, k: (i, 0, k)),
            pl.BlockSpec((C, M), lambda i, k: (0, 0)),
            pl.BlockSpec((1, M), lambda i, k: (0, 0)),
        ],
        out_specs=pl.BlockSpec((tn, M), lambda i, k: (i, 0)),
        scratch_shapes=[pltpu.VMEM((tn, C), jnp.float32)],
        compiler_params=pltpu.CompilerParams(
            dimension_semantics=("parallel", "arbitrary"),
            vmem_limit_bytes=_VMEM_LIMIT_BYTES,
        ),
        cost_estimate=cost,
    )(x3d, w_scaled, b2d)


def simple_head_forward(features, params):
    """features: list of (N, C_i, H_i, W_i); params: list of (W_i: (C_i, M), b_i: (M,))."""
    logits = []
    for feat, (w, b) in zip(features, params):
        logits.append(simple_head_single(feat, w, b))
    return logits


def init_params(input_shapes, n_classes, key):
    """Deterministic init mimicking nn.Linear default (uniform +/- 1/sqrt(fan_in))."""
    params = []
    for i, c in enumerate(input_shapes):
        kw, kb = jax.random.split(jax.random.fold_in(key, i))
        bound = 1.0 / math.sqrt(c)
        w = jax.random.uniform(kw, (c, n_classes), jnp.float32, -bound, bound)
        b = jax.random.uniform(kb, (n_classes,), jnp.float32, -bound, bound)
        params.append((w, b))
    return params


def _reference(features, params):
    out = []
    for feat, (w, b) in zip(features, params):
        pooled = jnp.mean(feat, axis=(2, 3))            # (N, C)
        out.append(pooled @ w + b)
    return out


if __name__ == "__main__":
    key = jax.random.PRNGKey(0)
    n_classes = 1
    # Two pyramid levels, NCHW as the PyTorch module expects.
    input_shapes = [4, 8]                               # channel dims per head
    feat_shapes = [(2, 4, 16, 16), (2, 8, 8, 8)]

    k_feats, k_params = jax.random.split(key)
    features = [
        jax.random.normal(jax.random.fold_in(k_feats, i), s, jnp.float32)
        for i, s in enumerate(feat_shapes)
    ]
    params = init_params(input_shapes, n_classes, k_params)

    logits = simple_head_forward(features, params)
    logits = [jax.block_until_ready(l) for l in logits]

    refs = _reference(features, params)
    for got, ref in zip(logits, refs):
        assert got.shape == ref.shape
        assert jnp.allclose(got, ref, atol=1e-4, rtol=1e-4), "mismatch vs reference"

    print("KERNEL_OK")
</pallas_src>

<mosaic_0001>
module attributes {stable_mosaic.version = 11 : i64} {
  func.func @_head_kernel(%arg0: i32, %arg1: i32, %arg2: memref<2x4x256xf32, #tpu.memory_space<vmem>>, %arg3: memref<4x1xf32, #tpu.memory_space<vmem>>, %arg4: memref<1x1xf32, #tpu.memory_space<vmem>>, %arg5: memref<2x1xf32, #tpu.memory_space<vmem>>, %arg6: memref<2x4xf32, #tpu.memory_space<vmem>>) attributes {dimension_semantics = [#tpu.dimension_semantics<parallel>, #tpu.dimension_semantics<arbitrary>], iteration_bounds = array<i64: 1, 1>, scalar_prefetch = 0 : i64, scratch_operands = 1 : i64, tpu.core_type = #tpu.core_type<tc>, window_params = [{transform_indices = @transform_0, window_bounds = array<i64: 2, 4, 256>}, {pipeline_mode = #tpu.pipeline_mode<synchronous>, transform_indices = @transform_1, window_bounds = array<i64: 4, 1>}, {pipeline_mode = #tpu.pipeline_mode<synchronous>, transform_indices = @transform_2, window_bounds = array<i64: 1, 1>}, {transform_indices = @transform_3, window_bounds = array<i64: 2, 1>}]} {
    %c0_i32 = arith.constant 0 : i32
    %0 = arith.cmpi eq, %arg1, %c0_i32 : i32
    %1 = arith.extui %0 : i1 to i32
    %c0_i32_0 = arith.constant 0 : i32
    %2 = arith.cmpi ne, %1, %c0_i32_0 : i32
    scf.if %2 {
      %cst_9 = arith.constant 0.000000e+00 : f32
      %11 = vector.broadcast %cst_9 : f32 to vector<2x4xf32>
      %c0_10 = arith.constant 0 : index
      %c0_11 = arith.constant 0 : index
      %12 = vector.load %arg6[%c0_10, %c0_11] : memref<2x4xf32, #tpu.memory_space<vmem>>, vector<2x4xf32>
      tpu.vector_store %arg6[%c0_10, %c0_11], %11 {strides = array<i32>} : memref<2x4xf32, #tpu.memory_space<vmem>>, vector<2x4xf32>,
    } else {
    }
    %c0 = arith.constant 0 : index
    %c0_1 = arith.constant 0 : index
    %3 = vector.load %arg6[%c0, %c0_1] : memref<2x4xf32, #tpu.memory_space<vmem>>, vector<2x4xf32>
    %c0_2 = arith.constant 0 : index
    %c0_3 = arith.constant 0 : index
    %c0_4 = arith.constant 0 : index
    %4 = vector.load %arg2[%c0_2, %c0_3, %c0_4] : memref<2x4x256xf32, #tpu.memory_space<vmem>>, vector<2x4x256xf32>
    %cst = arith.constant dense<0.000000e+00> : vector<2x4xf32>
    %5 = vector.multi_reduction <add>, %4, %cst [2] : vector<2x4x256xf32> to vector<2x4xf32>
    %6 = arith.addf %3, %5 : vector<2x4xf32>
    %c0_5 = arith.constant 0 : index
    %c0_6 = arith.constant 0 : index
    %7 = vector.load %arg6[%c0_5, %c0_6] : memref<2x4xf32, #tpu.memory_space<vmem>>, vector<2x4xf32>
    tpu.vector_store %arg6[%c0_5, %c0_6], %6 {strides = array<i32>} : memref<2x4xf32, #tpu.memory_space<vmem>>, vector<2x4xf32>,
    %c0_i32_7 = arith.constant 0 : i32
    %8 = arith.cmpi eq, %arg1, %c0_i32_7 : i32
    %9 = arith.extui %8 : i1 to i32
    %c0_i32_8 = arith.constant 0 : i32
    %10 = arith.cmpi ne, %9, %c0_i32_8 : i32
    scf.if %10 {
      %c0_9 = arith.constant 0 : index
      %c0_10 = arith.constant 0 : index
      %11 = vector.load %arg6[%c0_9, %c0_10] : memref<2x4xf32, #tpu.memory_space<vmem>>, vector<2x4xf32>
      %c0_11 = arith.constant 0 : index
      %c0_12 = arith.constant 0 : index
      %12 = vector.load %arg3[%c0_11, %c0_12] : memref<4x1xf32, #tpu.memory_space<vmem>>, vector<4x1xf32>
      %cst_13 = arith.constant dense<0.000000e+00> : vector<2x1xf32>
      %13 = tpu.matmul %11, %12, %cst_13 {dimension_numbers = #tpu.dot_dimension_numbers<[1], [0], [0], [1], [0, 0, 1, 1], [], []>} : vector<2x4xf32>, vector<4x1xf32>, vector<2x1xf32> -> vector<2x1xf32>
      %c0_14 = arith.constant 0 : index
      %c0_15 = arith.constant 0 : index
      %14 = vector.load %arg4[%c0_14, %c0_15] : memref<1x1xf32, #tpu.memory_space<vmem>>, vector<1x1xf32>
      %15 = vector.broadcast %14 : vector<1x1xf32> to vector<2x1xf32>
      %16 = arith.addf %13, %15 : vector<2x1xf32>
      %c0_16 = arith.constant 0 : index
      %c0_17 = arith.constant 0 : index
      %17 = vector.load %arg5[%c0_16, %c0_17] : memref<2x1xf32, #tpu.memory_space<vmem>>, vector<2x1xf32>
      tpu.vector_store %arg5[%c0_16, %c0_17], %16 {strides = array<i32>} : memref<2x1xf32, #tpu.memory_space<vmem>>, vector<2x1xf32>,
    } else {
    }
    return
  }
  func.func @transform_0(%arg0: i32, %arg1: i32) -> (i32, i32, i32) {
    %c0_i32 = arith.constant 0 : i32
    %c0_i32_0 = arith.constant 0 : i32
    return %arg0, %c0_i32, %arg1 : i32, i32, i32
  }
  func.func @transform_1(%arg0: i32, %arg1: i32) -> (i32, i32) {
    %c0_i32 = arith.constant 0 : i32
    %c0_i32_0 = arith.constant 0 : i32
    %c0_i32_1 = arith.constant 0 : i32
    return %c0_i32, %c0_i32_0 : i32, i32
  }
  func.func @transform_2(%arg0: i32, %arg1: i32) -> (i32, i32) {
    %c0_i32 = arith.constant 0 : i32
    %c0_i32_0 = arith.constant 0 : i32
    %c0_i32_1 = arith.constant 0 : i32
    return %c0_i32, %c0_i32_0 : i32, i32
  }
  func.func @transform_3(%arg0: i32, %arg1: i32) -> (i32, i32) {
    %c0_i32 = arith.constant 0 : i32
    %c0_i32_0 = arith.constant 0 : i32
    return %arg0, %c0_i32 : i32, i32
  }
}

</mosaic_0001>

<llo_original>
// kernel: tpu_custom_call.1
$region0: #{tpu_custom_call.1}
  #allocation0 [shape = 'u32[]', space=smem, size = 0x4, offset = 0x4, fixed_abs, tag = 'smem constant byte address 0x4 - core index']
  #allocation1 [shape = 'u32[144,128]{1,0:T(1,128)}', space=vmem, size = 0x12000, scoped, tag = 'internal scratch']
  #allocation2 [shape = 'f32[2,4]{1,0:T(2,128)}', space=vmem, size = 0x400, scoped, tag = 'scratch operand']
  #allocation3 [shape = 'f32[1,1]{1,0:T(1,128)S(1)}', space=vmem, size = 0x200, scoped, tag = 'scoped memory for tpu_custom_call.1']
  %s0 = inlined_call_operand.hbm [shape: f32[2,4,256], index: 0, kind: input, shape index: {}]
  %s1 = inlined_call_operand.vmem [shape: f32[4,1], index: 1, kind: input, shape index: {}]
  %s2 = inlined_call_operand.<no memory space> [shape: f32[1,1], index: 2, kind: input, shape index: {}]
  %s3 = inlined_call_operand.vmem [shape: f32[2,1], index: 3, kind: output, shape index: {}]
  %s4 = sld [smem:[#allocation0]]
  $region34: #{tpu_custom_call.1} parent=0
    _
  %s6 = ssub.s32 1, %s4
  %s7 = scalar_select 0, %s6, %s4
  %v8 = vstv %s2
  %9 = vst [vmem:[#allocation3] sm:$0x1] %v8
  $region1: #{tpu_custom_call.1} parent=0
    #allocation4 [shape = 'u8[8192]{0}', space=vmem, size = 0x2000, scoped, tag = 'input window, operand 0, single buffered']
    #allocation5 [shape = 's32[1]{0}', space=sflag, size = 0x4, scoped, tag = 'scoped memory for tpu_custom_call.1']
    %10 = vsyncpa [#allocation5], 0
    // Predicated region
    $region2: #{tpu_custom_call.1} parent=1 // pred_check
      _
    $region3: #{tpu_custom_call.1} parent=1 // pred_check_branch
      %12 = sbr.rel (0) target = $region5
    $region4: #{tpu_custom_call.1} parent=1 // pred_region
      %s14 = ssub.s32 256, 256
      %15 = vsyncadd [#allocation5], %s14
      %s16 = sshll.u32 [#allocation4], 4
      %s17 = int_to_ptr.vmem [resolvable:$true] %s16
      %22 = dma.hbm_to_vmem [thread:$0]  %s0, 256, %s17, [#allocation5], 128, 128, 8
    $region5: #{tpu_custom_call.1} parent=1 // pred_fallthru
      _
    // Predicated region
    $region6: #{tpu_custom_call.1} parent=1 // pred_check
      _
    $region7: #{tpu_custom_call.1} parent=1 // pred_check_branch
      %24 = sbr.rel (0) target = $region9
    $region8: #{tpu_custom_call.1} parent=1 // pred_region
      _
    $region9: #{tpu_custom_call.1} parent=1 // pred_fallthru
      _
    // Predicated region
    $region10: #{tpu_custom_call.1} parent=1 // pred_check
      _
    $region11: #{tpu_custom_call.1} parent=1 // pred_check_branch
      %26 = sbr.rel (0) target = $region13
    $region12: #{tpu_custom_call.1} parent=1 // pred_region
      _
    $region13: #{tpu_custom_call.1} parent=1 // pred_fallthru
      _
    // Predicated region
    $region14: #{tpu_custom_call.1} parent=1 // pred_check
      _
    $region15: #{tpu_custom_call.1} parent=1 // pred_check_branch
      %28 = sbr.rel (0) target = $region17
    $region16: #{tpu_custom_call.1} parent=1 // pred_region
      %29 = dma.done [#allocation5], 256
    $region17: #{tpu_custom_call.1} parent=1 // pred_fallthru
      _
    %p30 = scmp.eq.s32.totalorder 0, 0
    // Predicated region
    $region18: #{tpu_custom_call.1} parent=1 // pred_check
      %p31 = pneg %p30
    $region19: #{tpu_custom_call.1} parent=1 // pred_check_branch
      %33 = sbr.rel (%p31) target = $region21
    $region20: #{tpu_custom_call.1} parent=1 // pred_region
      %vm34 = vcmask 25600
      %35 = vst.msk [vmem:[#allocation2] sm:$0x3] %vm34, 0.0
    $region21: #{tpu_custom_call.1} parent=1 // pred_fallthru
      _
    %v36 = vld [vmem:[#allocation2] sm:$0x3]
    %v37 = vld [vmem:[#allocation4] sm:$0xff]
    %v38 = vld [vmem:[#allocation4 + $0x8] sm:$0xff]
    %v41 = vcombine.high %v37, %v37
    %v42 = vcombine.high %v38, %v38
    %vm45 = vcmask 1043456
    %v46 = vsel %vm45, %v37, 0.0
    %v47 = vsel %vm45, %v41, 0.0
    %v48 = vadd.f32 %v46, %v47
    %49 = vadd.xlane.f32.xlu0 %v48
    %v50 = vpop.xlane.xlu0 %49
    %v51 = vsel %vm45, %v38, 0.0
    %v52 = vsel %vm45, %v42, 0.0
    %v53 = vadd.f32 %v51, %v52
    %54 = vadd.xlane.f32.xlu0 %v53
    %v55 = vpop.xlane.xlu0 %54
    %v58 = vlaneseq
    %v59 = vand.u32 %v58, 127
    %v60 = vlaneseq
    %v61 = vshrl.u32 %v60, 7
    %v62 = vsub.s32 %v59, %v61
    %v63 = vrot.slane %v50, %v62
    %v64 = vlaneseq
    %v65 = vshrl.u32 %v64, 7
    %v66 = vsub.s32 %v59, %v65
    %v67 = vrot.slane %v55, %v66
    %vm68 = vcmask 1041409
    %v69 = vsel %vm68, %v67, %v63
    %v71 = vadd.f32 %v36, %v69
    %vm72 = vcmask 25600
    %73 = vst.msk [vmem:[#allocation2] sm:$0x3] %vm72, %v71
    // Predicated region
    $region22: #{tpu_custom_call.1} parent=1 // pred_check
      %p74 = pneg %p30
    $region23: #{tpu_custom_call.1} parent=1 // pred_check_branch
      %76 = sbr.rel (%p74) target = $region25
    $region24: #{tpu_custom_call.1} parent=1 // pred_region
      %v77 = vld [vmem:[#allocation2] sm:$0x3]
      %v78 = vld [vmem:[%s1] sm:$0xf]
      %v79 = vld [vmem:[#allocation3] sm:$0x1]
      %v81 = vlaneseq
      %v82 = vshrl.u32 %v81, 7
      %v83 = vsub.s32 0, %v82
      %v84 = vrot.slane %v79, %v83
      %vm86 = vcmask 31744
      %v88 = vsel %vm86, %v77, 0
      %v91 = vsel %vm45, %v78, 0
      %93 = vmatprep.subr.mxu0 0.0
      %94 = vmatpush1.msra.mxu0 0.0
      %95 = vmatprep.subr.mxu0 0.0
      %96 = vmatpush1.msra.mxu0 0.0
      %97 = vmatprep.subr.mxu0 0.0
      %98 = vmatpush1.msra.mxu0 0.0
      %99 = vmatprep.subr.mxu0 0.0
      %100 = vmatpush1.msra.mxu0 0.0
      %101 = vmatprep.subr.mxu0 0.0
      %102 = vmatpush1.msra.mxu0 0.0
      %103 = vmatprep.subr.mxu0 0.0
      %104 = vmatpush1.msra.mxu0 0.0
      %105 = vmatprep.subr.mxu0 0.0
      %106 = vmatpush1.msra.mxu0 0.0
      %107 = vmatprep.subr.mxu0 0.0
      %108 = vmatpush1.msra.mxu0 0.0
      %109 = vmatprep.subr.mxu0 0.0
      %110 = vmatpush1.msra.mxu0 0.0
      %111 = vmatprep.subr.mxu0 0.0
      %112 = vmatpush1.msra.mxu0 0.0
      %113 = vmatprep.subr.mxu0 0.0
      %114 = vmatpush1.msra.mxu0 0.0
      %115 = vmatprep.subr.mxu0 0.0
      %116 = vmatpush1.msra.mxu0 0.0
      %117 = vmatprep.subr.mxu0 0.0
      %118 = vmatpush1.msra.mxu0 0.0
      %119 = vmatprep.subr.mxu0 0.0
      %120 = vmatpush1.msra.mxu0 0.0
      %121 = vmatprep.subr.mxu0 0.0
      %122 = vmatpush1.msra.mxu0 0.0
      %123 = vmatprep.subr.mxu0 0.0
      %124 = vmatpush1.msra.mxu0 %v91
      %125 = vmatprep.subr.mxu0 0.0
      %126 = vmatpush2.msra.mxu0 0.0
      %127 = vmatprep.subr.mxu0 0.0
      %128 = vmatpush2.msra.mxu0 0.0
      %129 = vmatprep.subr.mxu0 0.0
      %130 = vmatpush2.msra.mxu0 0.0
      %131 = vmatprep.subr.mxu0 0.0
      %132 = vmatpush2.msra.mxu0 0.0
      %133 = vmatprep.subr.mxu0 0.0
      %134 = vmatpush2.msra.mxu0 0.0
      %135 = vmatprep.subr.mxu0 0.0
      %136 = vmatpush2.msra.mxu0 0.0
      %137 = vmatprep.subr.mxu0 0.0
      %138 = vmatpush2.msra.mxu0 0.0
      %139 = vmatprep.subr.mxu0 0.0
      %140 = vmatpush2.msra.mxu0 0.0
      %141 = vmatprep.subr.mxu0 0.0
      %142 = vmatpush2.msra.mxu0 0.0
      %143 = vmatprep.subr.mxu0 0.0
      %144 = vmatpush2.msra.mxu0 0.0
      %145 = vmatprep.subr.mxu0 0.0
      %146 = vmatpush2.msra.mxu0 0.0
      %147 = vmatprep.subr.mxu0 0.0
      %148 = vmatpush2.msra.mxu0 0.0
      %149 = vmatprep.subr.mxu0 0.0
      %150 = vmatpush2.msra.mxu0 0.0
      %151 = vmatprep.subr.mxu0 0.0
      %152 = vmatpush2.msra.mxu0 0.0
      %153 = vmatprep.subr.mxu0 0.0
      %154 = vmatpush2.msra.mxu0 0.0
      %155 = vmatprep.subr.mxu0 0.0
      %156 = vmatpush2.msra.mxu0 0.0
      %157 = vmatprep.mubr.f32.mxu0 0.0
      %158 = vmatmul.mubr.f32.gmra.mxu0 %v88
      %v159 = vpop.f32.mrf.mxu0
      %v160 = vadd.f32 %v84, %v159
      %v161 = vpop.f32.mrf.mxu0
      %162 = vdwg.mxu0
      %vm163 = vcmask 1024
      %164 = vst.msk [vmem:[%s3] sm:$0x3] %vm163, %v160
    $region25: #{tpu_custom_call.1} parent=1 // pred_fallthru
      _
    // Predicated region
    $region26: #{tpu_custom_call.1} parent=1 // pred_check
      _
    $region27: #{tpu_custom_call.1} parent=1 // pred_check_branch
      %166 = sbr.rel (0) target = $region29
    $region28: #{tpu_custom_call.1} parent=1 // pred_region
      _
    $region29: #{tpu_custom_call.1} parent=1 // pred_fallthru
      _
    // Predicated region
    $region30: #{tpu_custom_call.1} parent=1 // pred_check
      _
    $region31: #{tpu_custom_call.1} parent=1 // pred_check_branch
      %168 = sbr.rel (0) target = $region33
    $region32: #{tpu_custom_call.1} parent=1 // pred_region
      _
    $region33: #{tpu_custom_call.1} parent=1 // pred_fallthru
      _
    %169 = vsyncpa [#allocation5], 1

</llo_original>
